<compile_context>
chip_gen: v7x
topology: tpu7x:2x2x1
jax: 0.10.0
libtpu: 0.0.40
codegen_flags: <defaults>
</compile_context>

<pallas_src>
import functools

import jax
import jax.numpy as jnp
from jax.experimental import pallas as pl
from jax.experimental.pallas import tpu as pltpu


# --------------------------------------------------------------------------- #
# Kernel
# --------------------------------------------------------------------------- #
def mlp_kernel(x_ref, w1_ref, b1_ref, w2_ref, b2_ref, o_ref, acc_ref):
    """One (batch tile, hidden chunk) grid step of fc1 -> ReLU -> fc2."""
    hk_idx = pl.program_id(1)

    @pl.when(hk_idx == 0)
    def _init():
        acc_ref[...] = jnp.zeros_like(acc_ref)

    # fc1 chunk: MXU matmul with f32 accumulation; bias + ReLU on the VPU.
    h = jnp.dot(x_ref[...], w1_ref[...], preferred_element_type=jnp.float32)
    h = jnp.maximum(h + b1_ref[...].astype(jnp.float32), 0.0)

    # Feed the second matmul in the weights' dtype (bf16 path) while still
    # accumulating in f32 on the MXU.
    if w2_ref.dtype != jnp.float32:
        h = h.astype(w2_ref.dtype)

    # fc2 partial product for this hidden chunk, accumulated in f32 VMEM scratch.
    acc_ref[...] += jnp.dot(h, w2_ref[...], preferred_element_type=jnp.float32)

    @pl.when(hk_idx == pl.num_programs(1) - 1)
    def _finalize():
        # Lane-dense (TM, O_p) store -> unmasked vst.
        o_ref[...] = (acc_ref[...] + b2_ref[...].astype(jnp.float32)).astype(o_ref.dtype)


# --------------------------------------------------------------------------- #
# Host-side planning helpers
# --------------------------------------------------------------------------- #
def _round_up(x, m):
    return ((x + m - 1) // m) * m


def _sublane_multiple(dtype):
    # 8 rows for 4-byte dtypes, 16 for 2-byte, 32 for 1-byte (packed tiles).
    return max(8, 32 // jnp.dtype(dtype).itemsize)


@functools.lru_cache(maxsize=None)
def _vmem_capacity_bytes():
    try:
        return int(pltpu.get_tpu_info().vmem_capacity_bytes)
    except Exception:
        return 64 << 20  # conservative default: v7x per-TensorCore VMEM


def _plan_tiles(batch, i_p, h_p, o_p, hk, x_dtype, w_dtype, *, tm_max=512):
    """Pick the batch tile TM and an explicit VMEM limit from the chip's budget."""
    del h_p  # only the per-chunk footprint matters
    sub = _sublane_multiple(x_dtype)
    xb = jnp.dtype(x_dtype).itemsize
    wb = jnp.dtype(w_dtype).itemsize
    cap = _vmem_capacity_bytes()
    budget = cap // 2  # leave headroom for compiler temporaries / pipelining

    # Weight + bias chunk footprint, double-buffered (streamed over the hidden axis).
    w_bytes = 2 * ((i_p * hk + hk * o_p) * wb + (hk + o_p) * wb)

    b_round = _round_up(batch, sub)
    tm = min(_round_up(tm_max, sub), b_round)
    # If the batch spans at least two tiles' worth of rows, force >= 2 batch grid
    # steps so the "parallel" axis can actually shard across v7x's two TensorCores.
    if b_round >= 2 * sub and tm >= b_round:
        tm = _round_up(pl.cdiv(b_round, 2), sub)

    def act_bytes(t):
        return (2 * t * i_p * xb      # x tile, double-buffered
                + 2 * t * o_p * xb    # out tile, double-buffered
                + t * o_p * 4         # f32 accumulator scratch
                + t * hk * 4)         # f32 hidden-chunk temporary

    while tm > sub and w_bytes + act_bytes(tm) > budget:
        tm = _round_up(tm // 2, sub)

    est = w_bytes + act_bytes(tm)
    vmem_limit = int(min(0.75 * cap, max(32 << 20, est + (16 << 20))))
    return tm, vmem_limit


# --------------------------------------------------------------------------- #
# Parameter padding (done once, outside the per-call hot path)
# --------------------------------------------------------------------------- #
def pad_mlp_params(w1, b1, w2, b2, *, hk_target=512):
    """w1: (I, H) (PyTorch W1.T), b1: (H,), w2: (H, O) (W2.T), b2: (O,)."""
    i, h = w1.shape
    o = w2.shape[1]
    i_p = _round_up(i, 128)
    hk = min(hk_target, _round_up(h, 128))   # hidden chunk, multiple of 128
    h_p = _round_up(h, hk)
    o_p = _round_up(o, 128)

    w1_p = jnp.zeros((i_p, h_p), w1.dtype).at[:i, :h].set(w1)
    b1_p = jnp.zeros((1, h_p), b1.dtype).at[0, :h].set(b1)
    w2_p = jnp.zeros((h_p, o_p), w2.dtype).at[:h, :o].set(w2)
    b2_p = jnp.zeros((1, o_p), b2.dtype).at[0, :o].set(b2)
    return dict(w1=w1_p, b1=b1_p, w2=w2_p, b2=b2_p, hk=hk, out_features=o)


# --------------------------------------------------------------------------- #
# Forward pass
# --------------------------------------------------------------------------- #
@functools.partial(
    jax.jit, static_argnames=("tm", "hk", "out_features", "vmem_limit"))
def _mlp_forward_padded(x, w1_p, b1_p, w2_p, b2_p, *, tm, hk, out_features,
                        vmem_limit):
    batch, in_features = x.shape
    i_p, h_p = w1_p.shape
    o_p = w2_p.shape[1]
    b_p = _round_up(batch, tm)

    # Zero-pad the activations to lane/sublane-dense blocks (fuses under jit).
    # Padded columns/rows/lanes are all zero end-to-end, so the valid output
    # slice is untouched.
    x_p = jnp.zeros((b_p, i_p), x.dtype).at[:batch, :in_features].set(x)

    grid = (b_p // tm, h_p // hk)

    out_p = pl.pallas_call(
        mlp_kernel,
        out_shape=jax.ShapeDtypeStruct((b_p, o_p), x.dtype),
        grid=grid,
        in_specs=[
            pl.BlockSpec((tm, i_p), lambda i, h: (i, 0)),   # x: per-batch tile, resident over h
            pl.BlockSpec((i_p, hk), lambda i, h: (0, h)),   # w1 chunk, streamed over h
            pl.BlockSpec((1, hk), lambda i, h: (0, h)),     # b1 chunk
            pl.BlockSpec((hk, o_p), lambda i, h: (h, 0)),   # w2 chunk, streamed over h
            pl.BlockSpec((1, o_p), lambda i, h: (0, 0)),    # b2 (constant)
        ],
        # Lane-dense output tile, revisited across the hidden (reduction) axis.
        out_specs=pl.BlockSpec((tm, o_p), lambda i, h: (i, 0)),
        scratch_shapes=[pltpu.VMEM((tm, o_p), jnp.float32)],
        compiler_params=pltpu.CompilerParams(
            dimension_semantics=("parallel", "arbitrary"),
            vmem_limit_bytes=vmem_limit),
    )(x_p, w1_p, b1_p, w2_p, b2_p)

    return out_p[:batch, :out_features]


def mlp_forward(x, params):
    """x: (B, I).  params: output of pad_mlp_params.  Returns (B, O)."""
    w1_p, b1_p, w2_p, b2_p = params["w1"], params["b1"], params["w2"], params["b2"]
    hk, out_features = params["hk"], params["out_features"]
    i_p, h_p = w1_p.shape
    o_p = w2_p.shape[1]
    tm, vmem_limit = _plan_tiles(x.shape[0], i_p, h_p, o_p, hk,
                                 x.dtype, w1_p.dtype)
    return _mlp_forward_padded(x, w1_p, b1_p, w2_p, b2_p, tm=tm, hk=hk,
                               out_features=out_features, vmem_limit=vmem_limit)


def reference_mlp(x, w1, b1, w2, b2):
    h = jnp.maximum(x @ w1 + b1, 0.0)
    return h @ w2 + b2


# --------------------------------------------------------------------------- #
# Self-test
# --------------------------------------------------------------------------- #
if __name__ == "__main__":
    # Small shapes consistent with MLP(input_size=16, hidden_size=32, output_size=4).
    B, I, H, O = 8, 16, 32, 4

    key = jax.random.PRNGKey(0)
    kx, k1, kb1, k2, kb2 = jax.random.split(key, 5)

    x = jax.random.normal(kx, (B, I), dtype=jnp.float32)
    # Deterministic synthetic parameters (nn.Linear-like scale), stored as (in, out)
    # i.e. PyTorch's W.T so that x @ w + b == nn.Linear(x).
    w1 = jax.random.normal(k1, (I, H), dtype=jnp.float32) * (1.0 / jnp.sqrt(I))
    b1 = jax.random.normal(kb1, (H,), dtype=jnp.float32) * 0.01
    w2 = jax.random.normal(k2, (H, O), dtype=jnp.float32) * (1.0 / jnp.sqrt(H))
    b2 = jax.random.normal(kb2, (O,), dtype=jnp.float32) * 0.01

    params = pad_mlp_params(w1, b1, w2, b2)     # padded once, not per call

    out = mlp_forward(x, params)
    out = jax.block_until_ready(out)

    ref = reference_mlp(x, w1, b1, w2, b2)
    assert out.shape == (B, O)
    assert jnp.allclose(out, ref, atol=1e-5, rtol=1e-5), "mismatch vs reference"

    print("KERNEL_OK")
</pallas_src>

<mosaic_0001>
module attributes {stable_mosaic.version = 11 : i64} {
  func.func @mlp_kernel(%arg0: i32, %arg1: i32, %arg2: memref<8x128xf32, #tpu.memory_space<vmem>>, %arg3: memref<128x128xf32, #tpu.memory_space<vmem>>, %arg4: memref<1x128xf32, #tpu.memory_space<vmem>>, %arg5: memref<128x128xf32, #tpu.memory_space<vmem>>, %arg6: memref<1x128xf32, #tpu.memory_space<vmem>>, %arg7: memref<8x128xf32, #tpu.memory_space<vmem>>, %arg8: memref<8x128xf32, #tpu.memory_space<vmem>>) attributes {dimension_semantics = [#tpu.dimension_semantics<parallel>, #tpu.dimension_semantics<arbitrary>], iteration_bounds = array<i64: 1, 1>, scalar_prefetch = 0 : i64, scratch_operands = 1 : i64, tpu.core_type = #tpu.core_type<tc>, window_params = [{transform_indices = @transform_0, window_bounds = array<i64: 8, 128>}, {transform_indices = @transform_1, window_bounds = array<i64: 128, 128>}, {transform_indices = @transform_2, window_bounds = array<i64: 1, 128>}, {transform_indices = @transform_3, window_bounds = array<i64: 128, 128>}, {pipeline_mode = #tpu.pipeline_mode<synchronous>, transform_indices = @transform_4, window_bounds = array<i64: 1, 128>}, {transform_indices = @transform_5, window_bounds = array<i64: 8, 128>}]} {
    %c0_i32 = arith.constant 0 : i32
    %0 = arith.cmpi eq, %arg1, %c0_i32 : i32
    %1 = arith.extui %0 : i1 to i32
    %c0_i32_0 = arith.constant 0 : i32
    %2 = arith.cmpi ne, %1, %c0_i32_0 : i32
    scf.if %2 {
      %cst_16 = arith.constant 0.000000e+00 : f32
      %19 = vector.broadcast %cst_16 : f32 to vector<8x128xf32>
      %c0_17 = arith.constant 0 : index
      %c0_18 = arith.constant 0 : index
      %20 = vector.load %arg8[%c0_17, %c0_18] : memref<8x128xf32, #tpu.memory_space<vmem>>, vector<8x128xf32>
      tpu.vector_store %arg8[%c0_17, %c0_18], %19 {strides = array<i32>} : memref<8x128xf32, #tpu.memory_space<vmem>>, vector<8x128xf32>,
    } else {
    }
    %c0 = arith.constant 0 : index
    %c0_1 = arith.constant 0 : index
    %3 = vector.load %arg2[%c0, %c0_1] : memref<8x128xf32, #tpu.memory_space<vmem>>, vector<8x128xf32>
    %c0_2 = arith.constant 0 : index
    %c0_3 = arith.constant 0 : index
    %4 = vector.load %arg3[%c0_2, %c0_3] : memref<128x128xf32, #tpu.memory_space<vmem>>, vector<128x128xf32>
    %cst = arith.constant dense<0.000000e+00> : vector<8x128xf32>
    %5 = tpu.matmul %3, %4, %cst {dimension_numbers = #tpu.dot_dimension_numbers<[1], [0], [0], [1], [0, 0, 1, 1], [], []>} : vector<8x128xf32>, vector<128x128xf32>, vector<8x128xf32> -> vector<8x128xf32>
    %c0_4 = arith.constant 0 : index
    %c0_5 = arith.constant 0 : index
    %6 = vector.load %arg4[%c0_4, %c0_5] : memref<1x128xf32, #tpu.memory_space<vmem>>, vector<1x128xf32>
    %7 = vector.broadcast %6 : vector<1x128xf32> to vector<8x128xf32>
    %8 = arith.addf %5, %7 : vector<8x128xf32>
    %cst_6 = arith.constant 0.000000e+00 : f32
    %9 = vector.broadcast %cst_6 : f32 to vector<8x128xf32>
    %10 = arith.maximumf %8, %9 : vector<8x128xf32>
    %c0_7 = arith.constant 0 : index
    %c0_8 = arith.constant 0 : index
    %11 = vector.load %arg8[%c0_7, %c0_8] : memref<8x128xf32, #tpu.memory_space<vmem>>, vector<8x128xf32>
    %c0_9 = arith.constant 0 : index
    %c0_10 = arith.constant 0 : index
    %12 = vector.load %arg5[%c0_9, %c0_10] : memref<128x128xf32, #tpu.memory_space<vmem>>, vector<128x128xf32>
    %cst_11 = arith.constant dense<0.000000e+00> : vector<8x128xf32>
    %13 = tpu.matmul %10, %12, %cst_11 {dimension_numbers = #tpu.dot_dimension_numbers<[1], [0], [0], [1], [0, 0, 1, 1], [], []>} : vector<8x128xf32>, vector<128x128xf32>, vector<8x128xf32> -> vector<8x128xf32>
    %14 = arith.addf %11, %13 : vector<8x128xf32>
    %c0_12 = arith.constant 0 : index
    %c0_13 = arith.constant 0 : index
    %15 = vector.load %arg8[%c0_12, %c0_13] : memref<8x128xf32, #tpu.memory_space<vmem>>, vector<8x128xf32>
    tpu.vector_store %arg8[%c0_12, %c0_13], %14 {strides = array<i32>} : memref<8x128xf32, #tpu.memory_space<vmem>>, vector<8x128xf32>,
    %c0_i32_14 = arith.constant 0 : i32
    %16 = arith.cmpi eq, %arg1, %c0_i32_14 : i32
    %17 = arith.extui %16 : i1 to i32
    %c0_i32_15 = arith.constant 0 : i32
    %18 = arith.cmpi ne, %17, %c0_i32_15 : i32
    scf.if %18 {
      %c0_16 = arith.constant 0 : index
      %c0_17 = arith.constant 0 : index
      %19 = vector.load %arg8[%c0_16, %c0_17] : memref<8x128xf32, #tpu.memory_space<vmem>>, vector<8x128xf32>
      %c0_18 = arith.constant 0 : index
      %c0_19 = arith.constant 0 : index
      %20 = vector.load %arg6[%c0_18, %c0_19] : memref<1x128xf32, #tpu.memory_space<vmem>>, vector<1x128xf32>
      %21 = vector.broadcast %20 : vector<1x128xf32> to vector<8x128xf32>
      %22 = arith.addf %19, %21 : vector<8x128xf32>
      %c0_20 = arith.constant 0 : index
      %c0_21 = arith.constant 0 : index
      %23 = vector.load %arg7[%c0_20, %c0_21] : memref<8x128xf32, #tpu.memory_space<vmem>>, vector<8x128xf32>
      tpu.vector_store %arg7[%c0_20, %c0_21], %22 {strides = array<i32>} : memref<8x128xf32, #tpu.memory_space<vmem>>, vector<8x128xf32>,
    } else {
    }
    return
  }
  func.func @transform_0(%arg0: i32, %arg1: i32) -> (i32, i32) {
    %c0_i32 = arith.constant 0 : i32
    %c0_i32_0 = arith.constant 0 : i32
    return %arg0, %c0_i32 : i32, i32
  }
  func.func @transform_1(%arg0: i32, %arg1: i32) -> (i32, i32) {
    %c0_i32 = arith.constant 0 : i32
    %c0_i32_0 = arith.constant 0 : i32
    return %c0_i32, %arg1 : i32, i32
  }
  func.func @transform_2(%arg0: i32, %arg1: i32) -> (i32, i32) {
    %c0_i32 = arith.constant 0 : i32
    %c0_i32_0 = arith.constant 0 : i32
    return %c0_i32, %arg1 : i32, i32
  }
  func.func @transform_3(%arg0: i32, %arg1: i32) -> (i32, i32) {
    %c0_i32 = arith.constant 0 : i32
    %c0_i32_0 = arith.constant 0 : i32
    return %arg1, %c0_i32 : i32, i32
  }
  func.func @transform_4(%arg0: i32, %arg1: i32) -> (i32, i32) {
    %c0_i32 = arith.constant 0 : i32
    %c0_i32_0 = arith.constant 0 : i32
    %c0_i32_1 = arith.constant 0 : i32
    return %c0_i32, %c0_i32_0 : i32, i32
  }
  func.func @transform_5(%arg0: i32, %arg1: i32) -> (i32, i32) {
    %c0_i32 = arith.constant 0 : i32
    %c0_i32_0 = arith.constant 0 : i32
    return %arg0, %c0_i32 : i32, i32
  }
}

</mosaic_0001>

<llo_original>
// kernel: _mlp_forward_padded.1
$region0: #{_mlp_forward_padded.1}
  #allocation0 [shape = 'u32[]', space=smem, size = 0x4, offset = 0x4, fixed_abs, tag = 'smem constant byte address 0x4 - core index']
  #allocation1 [shape = 'u32[144,128]{1,0:T(1,128)}', space=vmem, size = 0x12000, scoped, tag = 'internal scratch']
  #allocation2 [shape = 'f32[8,128]{1,0:T(8,128)}', space=vmem, size = 0x1000, scoped, tag = 'scratch operand']
  %s0 = inlined_call_operand.vmem [shape: f32[8,128], index: 0, kind: input, shape index: {}]
  %s1 = inlined_call_operand.hbm [shape: f32[128,128], index: 1, kind: input, shape index: {}]
  %s2 = inlined_call_operand.vmem [shape: f32[1,128], index: 2, kind: input, shape index: {}]
  %s3 = inlined_call_operand.hbm [shape: f32[128,128], index: 3, kind: input, shape index: {}]
  %s4 = inlined_call_operand.vmem [shape: f32[1,128], index: 4, kind: input, shape index: {}]
  %s5 = inlined_call_operand.vmem [shape: f32[8,128], index: 5, kind: output, shape index: {}]
  %s6 = sld [smem:[#allocation0]]
  $region46: #{_mlp_forward_padded.1} parent=0
    _
  %s8 = ssub.s32 1, %s6
  %s9 = scalar_select 0, %s8, %s6
  $region1: #{_mlp_forward_padded.1} parent=0
    #allocation3 [shape = 'u8[65536]{0}', space=vmem, size = 0x10000, scoped, tag = 'input window, operand 1, single buffered']
    #allocation4 [shape = 's32[1]{0}', space=sflag, size = 0x4, scoped, tag = 'scoped memory for _mlp_forward_padded.1']
    #allocation5 [shape = 'u8[65536]{0}', space=vmem, size = 0x10000, scoped, tag = 'input window, operand 3, single buffered']
    #allocation6 [shape = 's32[1]{0}', space=sflag, size = 0x4, scoped, tag = 'scoped memory for _mlp_forward_padded.1']
    %10 = vsyncpa [#allocation4], 0
    %11 = vsyncpa [#allocation6], 0
    // Predicated region
    $region2: #{_mlp_forward_padded.1} parent=1 // pred_check
      _
    $region3: #{_mlp_forward_padded.1} parent=1 // pred_check_branch
      %13 = sbr.rel (0) target = $region5
    $region4: #{_mlp_forward_padded.1} parent=1 // pred_region
      _
    $region5: #{_mlp_forward_padded.1} parent=1 // pred_fallthru
      _
    // Predicated region
    $region6: #{_mlp_forward_padded.1} parent=1 // pred_check
      _
    $region7: #{_mlp_forward_padded.1} parent=1 // pred_check_branch
      %15 = sbr.rel (0) target = $region9
    $region8: #{_mlp_forward_padded.1} parent=1 // pred_region
      %s17 = ssub.s32 2048, 2048
      %18 = vsyncadd [#allocation4], %s17
      %s19 = sshll.u32 [#allocation3], 4
      %s20 = int_to_ptr.vmem [resolvable:$true] %s19
      %25 = dma.hbm_to_vmem [thread:$0]  %s1, 2048, %s20, [#allocation4], 128, 128, 8
    $region9: #{_mlp_forward_padded.1} parent=1 // pred_fallthru
      _
    // Predicated region
    $region10: #{_mlp_forward_padded.1} parent=1 // pred_check
      _
    $region11: #{_mlp_forward_padded.1} parent=1 // pred_check_branch
      %27 = sbr.rel (0) target = $region13
    $region12: #{_mlp_forward_padded.1} parent=1 // pred_region
      _
    $region13: #{_mlp_forward_padded.1} parent=1 // pred_fallthru
      _
    // Predicated region
    $region14: #{_mlp_forward_padded.1} parent=1 // pred_check
      _
    $region15: #{_mlp_forward_padded.1} parent=1 // pred_check_branch
      %29 = sbr.rel (0) target = $region17
    $region16: #{_mlp_forward_padded.1} parent=1 // pred_region
      %s31 = ssub.s32 2048, 2048
      %32 = vsyncadd [#allocation6], %s31
      %s33 = sshll.u32 [#allocation5], 4
      %s34 = int_to_ptr.vmem [resolvable:$true] %s33
      %39 = dma.hbm_to_vmem [thread:$0]  %s3, 2048, %s34, [#allocation6], 128, 128, 8
    $region17: #{_mlp_forward_padded.1} parent=1 // pred_fallthru
      _
    // Predicated region
    $region18: #{_mlp_forward_padded.1} parent=1 // pred_check
      _
    $region19: #{_mlp_forward_padded.1} parent=1 // pred_check_branch
      %41 = sbr.rel (0) target = $region21
    $region20: #{_mlp_forward_padded.1} parent=1 // pred_region
      _
    $region21: #{_mlp_forward_padded.1} parent=1 // pred_fallthru
      _
    // Predicated region
    $region22: #{_mlp_forward_padded.1} parent=1 // pred_check
      _
    $region23: #{_mlp_forward_padded.1} parent=1 // pred_check_branch
      %43 = sbr.rel (0) target = $region25
    $region24: #{_mlp_forward_padded.1} parent=1 // pred_region
      %44 = dma.done [#allocation4], 2048
    $region25: #{_mlp_forward_padded.1} parent=1 // pred_fallthru
      _
    // Predicated region
    $region26: #{_mlp_forward_padded.1} parent=1 // pred_check
      _
    $region27: #{_mlp_forward_padded.1} parent=1 // pred_check_branch
      %46 = sbr.rel (0) target = $region29
    $region28: #{_mlp_forward_padded.1} parent=1 // pred_region
      %47 = dma.done [#allocation6], 2048
    $region29: #{_mlp_forward_padded.1} parent=1 // pred_fallthru
      _
    %p48 = scmp.eq.s32.totalorder 0, 0
    // Predicated region
    $region30: #{_mlp_forward_padded.1} parent=1 // pred_check
      %p49 = pneg %p48
    $region31: #{_mlp_forward_padded.1} parent=1 // pred_check_branch
      %51 = sbr.rel (%p49) target = $region33
    $region32: #{_mlp_forward_padded.1} parent=1 // pred_region
      %52 = vst [vmem:[#allocation2] sm:$0xff] 0.0
    $region33: #{_mlp_forward_padded.1} parent=1 // pred_fallthru
      _
    %v53 = vld [vmem:[%s0] sm:$0xff]
    %v54 = vld [vmem:[#allocation3] sm:$0xff]
    %v55 = vld [vmem:[#allocation3 + $0x8] sm:$0xff]
    %v56 = vld [vmem:[#allocation3 + $0x10] sm:$0xff]
    %v57 = vld [vmem:[#allocation3 + $0x18] sm:$0xff]
    %v58 = vld [vmem:[#allocation3 + $0x20] sm:$0xff]
    %v59 = vld [vmem:[#allocation3 + $0x28] sm:$0xff]
    %v60 = vld [vmem:[#allocation3 + $0x30] sm:$0xff]
    %v61 = vld [vmem:[#allocation3 + $0x38] sm:$0xff]
    %v62 = vld [vmem:[#allocation3 + $0x40] sm:$0xff]
    %v63 = vld [vmem:[#allocation3 + $0x48] sm:$0xff]
    %v64 = vld [vmem:[#allocation3 + $0x50] sm:$0xff]
    %v65 = vld [vmem:[#allocation3 + $0x58] sm:$0xff]
    %v66 = vld [vmem:[#allocation3 + $0x60] sm:$0xff]
    %v67 = vld [vmem:[#allocation3 + $0x68] sm:$0xff]
    %v68 = vld [vmem:[#allocation3 + $0x70] sm:$0xff]
    %v69 = vld [vmem:[#allocation3 + $0x78] sm:$0xff]
    %v70 = vld [vmem:[%s2] sm:$0x1]
    %v72 = vlaneseq
    %v73 = vshrl.u32 %v72, 7
    %v74 = vsub.s32 0, %v73
    %v75 = vrot.slane %v70, %v74
    %77 = vmatprep.subr.mxu0 0.0
    %78 = vmatpush1.msra.mxu0 %v54
    %79 = vmatprep.subr.mxu0 0.0
    %80 = vmatpush1.msra.mxu0 %v55
    %81 = vmatprep.subr.mxu0 0.0
    %82 = vmatpush1.msra.mxu0 %v56
    %83 = vmatprep.subr.mxu0 0.0
    %84 = vmatpush1.msra.mxu0 %v57
    %85 = vmatprep.subr.mxu0 0.0
    %86 = vmatpush1.msra.mxu0 %v58
    %87 = vmatprep.subr.mxu0 0.0
    %88 = vmatpush1.msra.mxu0 %v59
    %89 = vmatprep.subr.mxu0 0.0
    %90 = vmatpush1.msra.mxu0 %v60
    %91 = vmatprep.subr.mxu0 0.0
    %92 = vmatpush1.msra.mxu0 %v61
    %93 = vmatprep.subr.mxu0 0.0
    %94 = vmatpush1.msra.mxu0 %v62
    %95 = vmatprep.subr.mxu0 0.0
    %96 = vmatpush1.msra.mxu0 %v63
    %97 = vmatprep.subr.mxu0 0.0
    %98 = vmatpush1.msra.mxu0 %v64
    %99 = vmatprep.subr.mxu0 0.0
    %100 = vmatpush1.msra.mxu0 %v65
    %101 = vmatprep.subr.mxu0 0.0
    %102 = vmatpush1.msra.mxu0 %v66
    %103 = vmatprep.subr.mxu0 0.0
    %104 = vmatpush1.msra.mxu0 %v67
    %105 = vmatprep.subr.mxu0 0.0
    %106 = vmatpush1.msra.mxu0 %v68
    %107 = vmatprep.subr.mxu0 0.0
    %108 = vmatpush1.msra.mxu0 %v69
    %109 = vmatprep.subr.mxu0 0.0
    %110 = vmatpush1.msra.mxu0 0.0
    %111 = vmatprep.subr.mxu0 0.0
    %112 = vmatpush1.msra.mxu0 0.0
    %113 = vmatprep.subr.mxu0 0.0
    %114 = vmatpush1.msra.mxu0 0.0
    %115 = vmatprep.subr.mxu0 0.0
    %116 = vmatpush1.msra.mxu0 0.0
    %117 = vmatprep.subr.mxu0 0.0
    %118 = vmatpush1.msra.mxu0 0.0
    %119 = vmatprep.subr.mxu0 0.0
    %120 = vmatpush1.msra.mxu0 0.0
    %121 = vmatprep.subr.mxu0 0.0
    %122 = vmatpush1.msra.mxu0 0.0
    %123 = vmatprep.subr.mxu0 0.0
    %124 = vmatpush1.msra.mxu0 0.0
    %125 = vmatprep.subr.mxu0 0.0
    %126 = vmatpush1.msra.mxu0 0.0
    %127 = vmatprep.subr.mxu0 0.0
    %128 = vmatpush1.msra.mxu0 0.0
    %129 = vmatprep.subr.mxu0 0.0
    %130 = vmatpush1.msra.mxu0 0.0
    %131 = vmatprep.subr.mxu0 0.0
    %132 = vmatpush1.msra.mxu0 0.0
    %133 = vmatprep.subr.mxu0 0.0
    %134 = vmatpush1.msra.mxu0 0.0
    %135 = vmatprep.subr.mxu0 0.0
    %136 = vmatpush1.msra.mxu0 0.0
    %137 = vmatprep.subr.mxu0 0.0
    %138 = vmatpush1.msra.mxu0 0.0
    %139 = vmatprep.subr.mxu0 0.0
    %140 = vmatpush1.msra.mxu0 0.0
    %141 = vmatprep.mubr.f32.mxu0 0.0
    %142 = vmatmul.mubr.f32.gmra.mrb[0].mxu0 %v53
    %v143 = vpop.f32.mrb[0].mxu0
    %v144 = vadd.f32 %v75, %v143
    %v145 = vpop.f32.mrb[0].mxu0
    %146 = vdwg.mxu0
    %v147 = vmax.f32 %v144, 0.0
    %v148 = vld [vmem:[#allocation2] sm:$0xff]
    %v149 = vld [vmem:[#allocation5] sm:$0xff]
    %v150 = vld [vmem:[#allocation5 + $0x8] sm:$0xff]
    %v151 = vld [vmem:[#allocation5 + $0x10] sm:$0xff]
    %v152 = vld [vmem:[#allocation5 + $0x18] sm:$0xff]
    %v153 = vld [vmem:[#allocation5 + $0x20] sm:$0xff]
    %v154 = vld [vmem:[#allocation5 + $0x28] sm:$0xff]
    %v155 = vld [vmem:[#allocation5 + $0x30] sm:$0xff]
    %v156 = vld [vmem:[#allocation5 + $0x38] sm:$0xff]
    %v157 = vld [vmem:[#allocation5 + $0x40] sm:$0xff]
    %v158 = vld [vmem:[#allocation5 + $0x48] sm:$0xff]
    %v159 = vld [vmem:[#allocation5 + $0x50] sm:$0xff]
    %v160 = vld [vmem:[#allocation5 + $0x58] sm:$0xff]
    %v161 = vld [vmem:[#allocation5 + $0x60] sm:$0xff]
    %v162 = vld [vmem:[#allocation5 + $0x68] sm:$0xff]
    %v163 = vld [vmem:[#allocation5 + $0x70] sm:$0xff]
    %v164 = vld [vmem:[#allocation5 + $0x78] sm:$0xff]
    %165 = vmatprep.subr.mxu0 0.0
    %166 = vmatpush1.msra.mxu0 %v149
    %167 = vmatprep.subr.mxu0 0.0
    %168 = vmatpush1.msra.mxu0 %v150
    %169 = vmatprep.subr.mxu0 0.0
    %170 = vmatpush1.msra.mxu0 %v151
    %171 = vmatprep.subr.mxu0 0.0
    %172 = vmatpush1.msra.mxu0 %v152
    %173 = vmatprep.subr.mxu0 0.0
    %174 = vmatpush1.msra.mxu0 %v153
    %175 = vmatprep.subr.mxu0 0.0
    %176 = vmatpush1.msra.mxu0 %v154
    %177 = vmatprep.subr.mxu0 0.0
    %178 = vmatpush1.msra.mxu0 %v155
    %179 = vmatprep.subr.mxu0 0.0
    %180 = vmatpush1.msra.mxu0 %v156
    %181 = vmatprep.subr.mxu0 0.0
    %182 = vmatpush1.msra.mxu0 %v157
    %183 = vmatprep.subr.mxu0 0.0
    %184 = vmatpush1.msra.mxu0 %v158
    %185 = vmatprep.subr.mxu0 0.0
    %186 = vmatpush1.msra.mxu0 %v159
    %187 = vmatprep.subr.mxu0 0.0
    %188 = vmatpush1.msra.mxu0 %v160
    %189 = vmatprep.subr.mxu0 0.0
    %190 = vmatpush1.msra.mxu0 %v161
    %191 = vmatprep.subr.mxu0 0.0
    %192 = vmatpush1.msra.mxu0 %v162
    %193 = vmatprep.subr.mxu0 0.0
    %194 = vmatpush1.msra.mxu0 %v163
    %195 = vmatprep.subr.mxu0 0.0
    %196 = vmatpush1.msra.mxu0 %v164
    %197 = vmatprep.subr.mxu0 0.0
    %198 = vmatpush1.msra.mxu0 0.0
    %199 = vmatprep.subr.mxu0 0.0
    %200 = vmatpush1.msra.mxu0 0.0
    %201 = vmatprep.subr.mxu0 0.0
    %202 = vmatpush1.msra.mxu0 0.0
    %203 = vmatprep.subr.mxu0 0.0
    %204 = vmatpush1.msra.mxu0 0.0
    %205 = vmatprep.subr.mxu0 0.0
    %206 = vmatpush1.msra.mxu0 0.0
    %207 = vmatprep.subr.mxu0 0.0
    %208 = vmatpush1.msra.mxu0 0.0
    %209 = vmatprep.subr.mxu0 0.0
    %210 = vmatpush1.msra.mxu0 0.0
    %211 = vmatprep.subr.mxu0 0.0
    %212 = vmatpush1.msra.mxu0 0.0
    %213 = vmatprep.subr.mxu0 0.0
    %214 = vmatpush1.msra.mxu0 0.0
    %215 = vmatprep.subr.mxu0 0.0
    %216 = vmatpush1.msra.mxu0 0.0
    %217 = vmatprep.subr.mxu0 0.0
    %218 = vmatpush1.msra.mxu0 0.0
    %219 = vmatprep.subr.mxu0 0.0
    %220 = vmatpush1.msra.mxu0 0.0
    %221 = vmatprep.subr.mxu0 0.0
    %222 = vmatpush1.msra.mxu0 0.0
    %223 = vmatprep.subr.mxu0 0.0
    %224 = vmatpush1.msra.mxu0 0.0
    %225 = vmatprep.subr.mxu0 0.0
    %226 = vmatpush1.msra.mxu0 0.0
    %227 = vmatprep.subr.mxu0 0.0
    %228 = vmatpush1.msra.mxu0 0.0
    %229 = vmatprep.mubr.f32.mxu0 0.0
    %230 = vmatmul.mubr.f32.gmra.mrb[0].mxu0 %v147
    %v231 = vpop.f32.mrb[0].mxu0
    %v232 = vadd.f32 0.0, %v231
    %v233 = vpop.f32.mrb[0].mxu0
    %234 = vdwg.mxu0
    %v235 = vadd.f32 %v148, %v232
    %236 = vst [vmem:[#allocation2] sm:$0xff] %v235
    // Predicated region
    $region34: #{_mlp_forward_padded.1} parent=1 // pred_check
      %p237 = pneg %p48
    $region35: #{_mlp_forward_padded.1} parent=1 // pred_check_branch
      %239 = sbr.rel (%p237) target = $region37
    $region36: #{_mlp_forward_padded.1} parent=1 // pred_region
      %v240 = vld [vmem:[#allocation2] sm:$0xff]
      %v241 = vld [vmem:[%s4] sm:$0x1]
      %v243 = vlaneseq
      %v244 = vshrl.u32 %v243, 7
      %v245 = vsub.s32 0, %v244
      %v246 = vrot.slane %v241, %v245
      %v248 = vadd.f32 %v240, %v246
      %249 = vst [vmem:[%s5] sm:$0xff] %v248
    $region37: #{_mlp_forward_padded.1} parent=1 // pred_fallthru
      _
    // Predicated region
    $region38: #{_mlp_forward_padded.1} parent=1 // pred_check
      _
    $region39: #{_mlp_forward_padded.1} parent=1 // pred_check_branch
      %251 = sbr.rel (0) target = $region41
    $region40: #{_mlp_forward_padded.1} parent=1 // pred_region
      _
    $region41: #{_mlp_forward_padded.1} parent=1 // pred_fallthru
      _
    // Predicated region
    $region42: #{_mlp_forward_padded.1} parent=1 // pred_check
      _
    $region43: #{_mlp_forward_padded.1} parent=1 // pred_check_branch
      %253 = sbr.rel (0) target = $region45
    $region44: #{_mlp_forward_padded.1} parent=1 // pred_region
      _
    $region45: #{_mlp_forward_padded.1} parent=1 // pred_fallthru
      _
    %254 = vsyncpa [#allocation4], 1
    %255 = vsyncpa [#allocation6], 1

</llo_original>
